<compile_context>
chip_gen: v6e
topology: v6e:2x2x1
jax: 0.10.0
libtpu: 0.0.40
codegen_flags: <defaults>
</compile_context>

<pallas_src>
import functools

import jax
import jax.numpy as jnp
from jax import lax
from jax.experimental import pallas as pl
from jax.experimental.pallas import tpu as pltpu

LANES = 128          # lane width of a vreg / last block dim
SLAB_ROWS = 512      # rows per in-kernel accumulation slab (multiple of 32)


def _chip_config():
    """Returns (block_bytes, max_shards) chosen per TPU generation."""
    vmem_bytes = 128 * 1024 * 1024
    try:
        info = pltpu.get_tpu_info()
        vmem_bytes = int(getattr(info, "vmem_capacity_bytes", vmem_bytes))
    except Exception:
        vmem_bytes = 128 * 1024 * 1024
    if vmem_bytes <= 64 * 1024 * 1024:
        # v7x-class: 64 MiB VMEM per TensorCore, 2 TensorCores, ~3.2 TB/s HBM.
        # 8 MiB blocks x 2 double-buffers = 16 MiB (< 32 MiB scoped default).
        return 8 * 1024 * 1024, 2
    # v5e / v6e class: single TensorCore, 128 MiB VMEM.  4 MiB blocks keep the
    # double-buffered input at 8 MiB, inside v5e's 16 MiB scoped default, and
    # are already deep in the DMA-bound regime.
    return 4 * 1024 * 1024, 1


def _partial_sum_kernel(x_ref, o_ref, *, slabs_per_tile, slab_rows):
    """Accumulates a (rows_per_tile, 128) tile into the per-shard (8,128) output."""
    # The output block is the accumulator (same block across the "arbitrary"
    # j axis); zero it at the start of each shard's reduction.
    @pl.when(pl.program_id(1) == 0)
    def _():
        o_ref[...] = jnp.zeros_like(o_ref)

    if slabs_per_tile == 1:
        # Whole tile in one shot (small inputs).
        chunk = x_ref[...].astype(jnp.float32)
        o_ref[...] += jnp.sum(chunk.reshape(-1, 8, LANES), axis=0)
    else:
        # Walk the block in slabs; the carried (8,128) f32 accumulator lives
        # in vregs, so the f32 cast of a bf16 block never materialises a
        # whole-block temp in VMEM.  Pure VALU work, hidden under the DMA.
        def body(k, acc):
            r = pl.multiple_of(k * slab_rows, slab_rows)
            chunk = x_ref[pl.ds(r, slab_rows), :].astype(jnp.float32)
            return acc + jnp.sum(chunk.reshape(-1, 8, LANES), axis=0)

        o_ref[...] += lax.fori_loop(
            0, slabs_per_tile, body, jnp.zeros((8, LANES), jnp.float32))


@functools.partial(jax.jit, static_argnames=("negation",))
def itself_loss(x, negation=True):
    """Pallas equivalent of ItselfLoss.forward(x, negation)."""
    count = x.size
    flat = jnp.ravel(x)                       # free reshape of a contiguous array

    rows_total = count // LANES
    rem = count - rows_total * LANES

    itemsize = jnp.dtype(x.dtype).itemsize
    sublane_min = {4: 8, 2: 16, 1: 32}.get(itemsize, 8)

    # Slab granularity handled by the kernel (always a multiple of the dtype's
    # sublane minimum).  Rows beyond a whole number of slabs/tiles go to the
    # wrapper-side sum together with the <128-element tail.
    if rows_total >= SLAB_ROWS:
        slab_rows = SLAB_ROWS
    else:
        slab_rows = (rows_total // sublane_min) * sublane_min

    if slab_rows == 0:
        # Degenerate tiny input: nothing worth tiling for the kernel.
        total = jnp.sum(flat, dtype=jnp.float32)
    else:
        block_bytes, max_shards = _chip_config()

        block_rows = block_bytes // (itemsize * LANES)
        max_rows = max(slab_rows, (block_rows // slab_rows) * slab_rows)
        rows_per_tile = min(max_rows, (rows_total // slab_rows) * slab_rows)
        slabs_per_tile = rows_per_tile // slab_rows

        n_full_tiles = rows_total // rows_per_tile
        num_shards = max_shards if n_full_tiles >= max_shards else 1
        tiles_per_shard = n_full_tiles // num_shards
        # Rows actually read by the kernel; the grid covers them exactly
        # (no partial tiles, no clamped duplicates, no in-kernel masking).
        rows_grid = num_shards * tiles_per_shard * rows_per_tile

        if rem:
            # count % 128 != 0: the lane-aligned prefix needs an explicit slice.
            main = flat[: rows_total * LANES].reshape(rows_total, LANES)
            tail = flat[rows_total * LANES:]
        else:
            main = flat.reshape(rows_total, LANES)   # free, no copy
            tail = None

        kernel = functools.partial(
            _partial_sum_kernel,
            slabs_per_tile=slabs_per_tile,
            slab_rows=slab_rows,
        )

        psums = pl.pallas_call(
            kernel,
            out_shape=jax.ShapeDtypeStruct((num_shards, 8, LANES), jnp.float32),
            grid_spec=pltpu.PrefetchScalarGridSpec(
                num_scalar_prefetch=0,
                grid=(num_shards, tiles_per_shard),
                in_specs=[pl.BlockSpec(
                    (rows_per_tile, LANES),
                    lambda i, j: (i * tiles_per_shard + j, 0))],
                # Per-shard (8,128) f32 accumulator; leading dim squeezed.
                out_specs=pl.BlockSpec((None, 8, LANES), lambda i, j: (i, 0, 0)),
            ),
            compiler_params=pltpu.CompilerParams(
                dimension_semantics=("parallel", "arbitrary"),
            ),
            cost_estimate=pl.CostEstimate(
                flops=rows_grid * LANES,
                transcendentals=0,
                bytes_accessed=rows_grid * LANES * itemsize
                + num_shards * 8 * LANES * 4,
            ),
        )(main)

        # Final cross-lane reduce + leftover rows + <128-element tail, all in
        # the wrapper (tiny; slices fuse into the reduces, so reads only).
        total = jnp.sum(psums, dtype=jnp.float32)
        if rows_grid < rows_total:
            total = total + jnp.sum(main[rows_grid:], dtype=jnp.float32)
        if tail is not None:
            total = total + jnp.sum(tail, dtype=jnp.float32)

    mean = total / jnp.float32(count)
    if negation:
        mean = -mean
    return mean.astype(x.dtype)


if __name__ == "__main__":
    key = jax.random.PRNGKey(0)
    k1, k2, k3 = jax.random.split(key, 3)

    # Primary small NCHW input (spec shape): single tile, single slab.
    x = jax.random.normal(k1, (2, 4, 16, 16), dtype=jnp.float32)
    loss_neg = itself_loss(x, negation=True)
    loss_pos = itself_loss(x, negation=False)
    jax.block_until_ready((loss_neg, loss_pos))
    assert jnp.allclose(loss_neg, -jnp.mean(x), atol=1e-6), (loss_neg, -jnp.mean(x))
    assert jnp.allclose(loss_pos, jnp.mean(x), atol=1e-6), (loss_pos, jnp.mean(x))

    # Non-lane-aligned input: exercises the slab loop, the leftover-row path
    # and the <128-element tail summed in the wrapper.
    y = jax.random.normal(k2, (4, 5, 257, 129), dtype=jnp.float32)
    loss_y = itself_loss(y)
    jax.block_until_ready(loss_y)
    assert jnp.allclose(loss_y, -jnp.mean(y), atol=1e-5, rtol=1e-4), (loss_y, -jnp.mean(y))

    # Lane-aligned multi-tile input (free reshape, no copy): exercises the
    # multi-step accumulation along the "arbitrary" grid axis.
    z = jax.random.normal(k3, (2, 8, 330, 400), dtype=jnp.float32)
    loss_z = itself_loss(z)
    jax.block_until_ready(loss_z)
    assert jnp.allclose(loss_z, -jnp.mean(z), atol=1e-5, rtol=1e-4), (loss_z, -jnp.mean(z))

    print("KERNEL_OK")
</pallas_src>

<mosaic_0001>
module attributes {stable_mosaic.version = 11 : i64} {
  func.func @_partial_sum_kernel(%arg0: i32, %arg1: i32, %arg2: memref<16x128xf32, #tpu.memory_space<vmem>>, %arg3: memref<1x8x128xf32, #tpu.memory_space<vmem>>) attributes {dimension_semantics = [#tpu.dimension_semantics<parallel>, #tpu.dimension_semantics<arbitrary>], iteration_bounds = array<i64: 1, 1>, scalar_prefetch = 0 : i64, scratch_operands = 0 : i64, tpu.core_type = #tpu.core_type<tc>, window_params = [{transform_indices = @transform_0, window_bounds = array<i64: 16, 128>}, {transform_indices = @transform_1, window_bounds = array<i64: 1, 8, 128>}]} {
    %c0_i32 = arith.constant 0 : i32
    %0 = arith.cmpi eq, %arg1, %c0_i32 : i32
    %1 = arith.extui %0 : i1 to i32
    %c0_i32_0 = arith.constant 0 : i32
    %2 = arith.cmpi ne, %1, %c0_i32_0 : i32
    scf.if %2 {
      %cst_8 = arith.constant 0.000000e+00 : f32
      %12 = vector.broadcast %cst_8 : f32 to vector<8x128xf32>
      %c0_9 = arith.constant 0 : index
      %c0_10 = arith.constant 0 : index
      %c0_11 = arith.constant 0 : index
      %13 = vector.load %arg3[%c0_9, %c0_10, %c0_11] : memref<1x8x128xf32, #tpu.memory_space<vmem>>, vector<1x8x128xf32>
      %14 = vector.shape_cast %13 : vector<1x8x128xf32> to vector<8x128xf32>
      %15 = vector.shape_cast %12 : vector<8x128xf32> to vector<1x8x128xf32>
      tpu.vector_store %arg3[%c0_9, %c0_10, %c0_11], %15 {strides = array<i32>} : memref<1x8x128xf32, #tpu.memory_space<vmem>>, vector<1x8x128xf32>,
    } else {
    }
    %c0 = arith.constant 0 : index
    %c0_1 = arith.constant 0 : index
    %3 = vector.load %arg2[%c0, %c0_1] : memref<16x128xf32, #tpu.memory_space<vmem>>, vector<16x128xf32>
    %c0_2 = arith.constant 0 : index
    %c0_3 = arith.constant 0 : index
    %c0_4 = arith.constant 0 : index
    %4 = vector.load %arg3[%c0_2, %c0_3, %c0_4] : memref<1x8x128xf32, #tpu.memory_space<vmem>>, vector<1x8x128xf32>
    %5 = vector.shape_cast %4 : vector<1x8x128xf32> to vector<8x128xf32>
    %6 = vector.shape_cast %3 : vector<16x128xf32> to vector<2x8x128xf32>
    %cst = arith.constant dense<0.000000e+00> : vector<8x128xf32>
    %7 = vector.multi_reduction <add>, %6, %cst [0] : vector<2x8x128xf32> to vector<8x128xf32>
    %8 = arith.addf %5, %7 : vector<8x128xf32>
    %c0_5 = arith.constant 0 : index
    %c0_6 = arith.constant 0 : index
    %c0_7 = arith.constant 0 : index
    %9 = vector.load %arg3[%c0_5, %c0_6, %c0_7] : memref<1x8x128xf32, #tpu.memory_space<vmem>>, vector<1x8x128xf32>
    %10 = vector.shape_cast %9 : vector<1x8x128xf32> to vector<8x128xf32>
    %11 = vector.shape_cast %8 : vector<8x128xf32> to vector<1x8x128xf32>
    tpu.vector_store %arg3[%c0_5, %c0_6, %c0_7], %11 {strides = array<i32>} : memref<1x8x128xf32, #tpu.memory_space<vmem>>, vector<1x8x128xf32>,
    return
  }
  func.func @transform_0(%arg0: i32, %arg1: i32) -> (i32, i32) {
    %c1_i32 = arith.constant 1 : i32
    %0 = arith.muli %arg0, %c1_i32 : i32
    %1 = arith.addi %0, %arg1 : i32
    %c0_i32 = arith.constant 0 : i32
    %c0_i32_0 = arith.constant 0 : i32
    return %1, %c0_i32 : i32, i32
  }
  func.func @transform_1(%arg0: i32, %arg1: i32) -> (i32, i32, i32) {
    %c0_i32 = arith.constant 0 : i32
    %c0_i32_0 = arith.constant 0 : i32
    %c0_i32_1 = arith.constant 0 : i32
    return %arg0, %c0_i32, %c0_i32_0 : i32, i32, i32
  }
}

</mosaic_0001>

<llo_original>
// kernel: itself_loss.1
$region0: #{itself_loss.1}
  #allocation0 [shape = 'u32[]', space=smem, size = 0x4, offset = 0x4, fixed_abs, tag = 'smem constant byte address 0x4 - core index']
  #allocation1 [shape = 'u32[144,128]{1,0:T(1,128)}', space=vmem, size = 0x12000, scoped, tag = 'internal scratch']
  %s0 = inlined_call_operand.vmem [shape: f32[16,128], index: 0, kind: input, shape index: {}]
  %s1 = inlined_call_operand.vmem [shape: f32[1,8,128], index: 1, kind: output, shape index: {}]
  %s2 = sld [smem:[#allocation0]]
  $region18: #{itself_loss.1} parent=0
    _
  %s4 = ssub.s32 1, %s2
  %s5 = scalar_select 0, %s4, %s2
  // Predicated region
  $region2: #{itself_loss.1} parent=0 // pred_check
    _
  $region3: #{itself_loss.1} parent=0 // pred_check_branch
    %7 = sbr.rel (0) target = $region5
  $region4: #{itself_loss.1} parent=0 // pred_region
    %s8 = sadd.s32 0, 0
    %s9 = smul.u32 2, %s8
    %p10 = scmp.lt.s32.totalorder %s9, 1
    %s11 = scalar_select %p10, %s9, 1
    %s12 = smul.addr %s11, 8
    %s13 = scalar_lea.vmem %s0, %s12
    %s14 = sadd.s32 0, 0
    %s15 = smul.u32 2, %s14
  $region5: #{itself_loss.1} parent=0 // pred_fallthru
    _
  %s16 = sadd.s32 0, 0
  %s17 = smul.u32 2, %s16
  %p18 = scmp.lt.s32.totalorder %s17, 1
  %s19 = scalar_select %p18, %s17, 1
  %s20 = smul.addr %s19, 8
  %s21 = scalar_lea.vmem %s0, %s20
  %s22 = sadd.s32 0, 0
  %s23 = smul.u32 2, %s22
  %p24 = scmp.lt.s32.totalorder %s23, 1
  %s25 = scalar_select %p24, %s23, 1
  %s26 = smul.addr %s25, 8
  %s27 = scalar_lea.vmem %s0, %s26
  %s28 = sadd.s32 0, 0
  %s29 = smul.u32 2, %s28
  %p30 = scmp.eq.s32.totalorder 0, 0
  // Predicated region
  $region6: #{itself_loss.1} parent=0 // pred_check
    %p31 = pneg %p30
  $region7: #{itself_loss.1} parent=0 // pred_check_branch
    %33 = sbr.rel (%p31) target = $region9
  $region8: #{itself_loss.1} parent=0 // pred_region
    %34 = vst [vmem:[%s1] sm:$0xff] 0.0
  $region9: #{itself_loss.1} parent=0 // pred_fallthru
    _
  %v35 = vld [vmem:[%s27] sm:$0xff]
  %v36 = vld [vmem:[%s27 + $0x8] sm:$0xff]
  %v37 = vld [vmem:[%s1] sm:$0xff]
  %v38 = vadd.f32 %v35, %v36
  %v39 = vadd.f32 %v37, %v38
  %40 = vst [vmem:[%s1] sm:$0xff] %v39
  // Predicated region
  $region10: #{itself_loss.1} parent=0 // pred_check
    _
  $region11: #{itself_loss.1} parent=0 // pred_check_branch
    %42 = sbr.rel (0) target = $region13
  $region12: #{itself_loss.1} parent=0 // pred_region
    _
  $region13: #{itself_loss.1} parent=0 // pred_fallthru
    _
  // Predicated region
  $region14: #{itself_loss.1} parent=0 // pred_check
    _
  $region15: #{itself_loss.1} parent=0 // pred_check_branch
    %44 = sbr.rel (0) target = $region17
  $region16: #{itself_loss.1} parent=0 // pred_region
    _
  $region17: #{itself_loss.1} parent=0 // pred_fallthru
    _

</llo_original>
